<compile_context>
chip_gen: v5e
topology: v5e:2x2
jax: 0.10.0
libtpu: 0.0.40
codegen_flags: <defaults>
</compile_context>

<pallas_src>
import functools

import jax
import jax.numpy as jnp
from jax import lax
from jax.experimental import pallas as pl
from jax.experimental.pallas import tpu as pltpu


# ----------------------------------------------------------------------------
# Pallas kernel: one batch element per grid step, NCT layout (channels on
# sublanes, time on lanes).  Time is processed in static chunks so every
# slice offset is a compile-time constant.
# ----------------------------------------------------------------------------
def _msblock_kernel(x_ref, w7_ref, w3r_ref, wf_ref, bias_ref, out_ref, *,
                    C, d, chunks, fuse_res):
    # x_ref   : (C, T + 6d) bf16   zero-padded input row for this batch element
    # w7_ref  : (C, 7C)     bf16   k=7 branch weights, taps stacked along K
    # w3r_ref : (2C, 3C)    bf16   rows[:C] = k=3 branch, rows[C:] = residual
    # wf_ref  : (C, 2C)     bf16   fusion 1x1 weights
    # bias_ref: (C, 3)      f32    cols: k3 bias | k7 bias | residual+fusion bias
    # out_ref : (C, T)      out dtype
    w7 = w7_ref[...]                                  # hoisted weight loads
    w3r = w3r_ref[...]
    wf = wf_ref[...]
    b3_bias = bias_ref[:, 0:1]
    b7_bias = bias_ref[:, 1:2]
    rf_bias = bias_ref[:, 2:3]

    for t0, tw in chunks:                             # static unroll, static offsets
        win = x_ref[:, t0:t0 + tw + 6 * d]            # (C, tw + 6d) bf16
        taps = [win[:, k * d:k * d + tw] for k in range(7)]
        x7 = jnp.concatenate(taps, axis=0)            # (7C, tw) im2col for k=7
        x3 = jnp.concatenate(taps[2:5], axis=0)       # (3C, tw) taps 2d, 3d, 4d

        b7 = jnp.dot(w7, x7, preferred_element_type=jnp.float32)       # (C, tw)
        if fuse_res:
            # dilation == 1: residual taps (3d-1..3d+1) coincide with the k=3
            # taps, so one (2C, 3C) matmul yields both results.
            br = jnp.dot(w3r, x3, preferred_element_type=jnp.float32)  # (2C, tw)
            b3, res = br[:C], br[C:]
        else:
            b3 = jnp.dot(w3r[:C], x3, preferred_element_type=jnp.float32)
            xr = jnp.concatenate(
                [win[:, 3 * d - 1 + k:3 * d - 1 + k + tw] for k in range(3)],
                axis=0)                               # (3C, tw) taps 3d-1..3d+1
            res = jnp.dot(w3r[C:], xr, preferred_element_type=jnp.float32)

        # f32 elementwise epilogue (v5e has no bf16 VPU path); bf16 only at the
        # MXU input of the fusion matmul and at the final store.
        b3 = jnp.maximum(b3 + b3_bias, 0.0)
        b7 = jnp.maximum(b7 + b7_bias, 0.0)
        branches = jnp.concatenate([b3, b7], axis=0).astype(jnp.bfloat16)
        fused = jnp.dot(wf, branches, preferred_element_type=jnp.float32)
        # Dropout(0.2) is identity in eval mode.
        out_ref[:, t0:t0 + tw] = jnp.maximum(fused + res + rf_bias,
                                             0.0).astype(out_ref.dtype)


# ----------------------------------------------------------------------------
# Wrapper: BN folding, im2col weight packing, generation-aware sizing.
# ----------------------------------------------------------------------------
def multi_scale_temporal_block(x_nct, params, dilation=1, t_tile=None,
                               out_dtype=jnp.bfloat16):
    """x_nct: (B, C, T) float32 — same layout as the PyTorch module input."""
    B, C, T = x_nct.shape
    d = int(dilation)
    h = 3 * d                              # k=7 branch half-window (largest halo)
    Tp = T + 2 * h
    eps = 1e-5

    # ---- generation-aware VMEM budget (v5e/v6e: 128 MiB, v7x: 64 MiB) -------
    try:
        vmem_cap = int(getattr(pltpu.get_tpu_info(), "vmem_capacity_bytes",
                               64 * 1024 * 1024))
    except Exception:
        vmem_cap = 64 * 1024 * 1024

    # ---- time-chunk size: as large as the budget allows ---------------------
    if t_tile is None:
        budget = max(vmem_cap // 8, 4 * 1024 * 1024)
        tc = min(T, max(128, budget // (48 * C)))     # ~48*C*tc bytes of temporaries
        if tc < T:
            tc = (tc // 128) * 128                    # lane-dense output stores
    else:
        tc = min(int(t_tile), T)
    chunks = tuple((s, min(tc, T - s)) for s in range(0, T, tc))

    # ---- fold eval-mode BatchNorm into conv weights / biases (in f32) -------
    def bn_fold(g, b, m, v):
        s = g / jnp.sqrt(v + eps)
        return s, b - m * s

    s3, o3 = bn_fold(*params["bn3"])
    s7, o7 = bn_fold(*params["bn7"])
    sr, orr = bn_fold(*params["bnr"])

    w3 = params["w3"]                      # (C, C, 3)  (out, in, tap)
    w7 = params["w7"]                      # (C, C, 7)
    dw = params["dw"][:, 0, :]             # (C, 3)     depthwise taps
    wpw = params["wpw"][:, :, 0]           # (C, C)     residual 1x1

    # im2col weight layout: taps concatenated along the contraction axis,
    # matching the tap-major row order of the in-kernel X7 / X3 / Xr stacks.
    w7_big = (s7[:, None, None] * w7).transpose(0, 2, 1).reshape(C, 7 * C)
    w3_big = (s3[:, None, None] * w3).transpose(0, 2, 1).reshape(C, 3 * C)
    wres_big = (sr[:, None, None] * (wpw[:, :, None] * dw[None, :, :])
                ).transpose(0, 2, 1).reshape(C, 3 * C)
    w3r = jnp.concatenate([w3_big, wres_big], axis=0).astype(jnp.bfloat16)
    w7_big = w7_big.astype(jnp.bfloat16)
    wf = params["wf"][:, :, 0].astype(jnp.bfloat16)                    # (C, 2C)

    b3_bias = s3 * params["b3"] + o3
    b7_bias = s7 * params["b7"] + o7
    res_bias = sr * (wpw @ params["dwb"] + params["pwb"]) + orr
    bias_all = jnp.stack([b3_bias, b7_bias, res_bias + params["fb"]],
                         axis=1).astype(jnp.float32)                   # (C, 3)

    # ---- padded bf16 input: single fused pad+cast pass (no window stack) ----
    xp = jnp.pad(x_nct, ((0, 0), (0, 0), (h, h))).astype(jnp.bfloat16)

    # TODO(synk): for very long sequences where C*(T+6d) exceeds the VMEM
    # budget, stream time tiles with a manual halo DMA (memory_space=pl.ANY +
    # make_async_copy double buffer) instead of holding the full row in VMEM.
    out_bytes = jnp.dtype(out_dtype).itemsize
    need = (4 * C * Tp                     # bf16 input block, double-buffered
            + 2 * C * T * out_bytes        # output block, double-buffered
            + 4 * 15 * C * C               # bf16 weights, double-buffered
            + 48 * C * tc                  # im2col + f32 temporaries per chunk
            + 4 * 1024 * 1024)             # slack
    vmem_limit = int(min(int(0.9 * vmem_cap),
                         max(32 * 1024 * 1024, 2 * need)))

    kernel = functools.partial(_msblock_kernel, C=C, d=d, chunks=chunks,
                               fuse_res=(d == 1))

    flops = 2 * 15 * B * T * C * C         # 7C + 3C + 3C + 2C MACs per element
    bytes_accessed = (B * C * Tp * 2 + B * C * T * out_bytes
                      + 15 * C * C * 2 + 3 * C * 4)

    # TODO(synk): single-buffer the constant-index-map weight specs
    # (pipeline_mode=pl.Buffered(1)) once that path is exercised on v7x; the
    # weight footprint at the tested sizes is negligible.
    # TODO(synk): for tiny (B, C) workloads, merge several batch rows into one
    # grid step (wider matmul N) while keeping >= 2 parallel steps for v7x.
    out = pl.pallas_call(
        kernel,
        out_shape=jax.ShapeDtypeStruct((B, C, T), out_dtype),
        grid_spec=pltpu.PrefetchScalarGridSpec(
            num_scalar_prefetch=0,
            grid=(B,),
            in_specs=[
                pl.BlockSpec((None, C, Tp), lambda b: (b, 0, 0)),   # padded input
                pl.BlockSpec((C, 7 * C), lambda b: (0, 0)),         # k=7 weights
                pl.BlockSpec((2 * C, 3 * C), lambda b: (0, 0)),     # k=3 + residual
                pl.BlockSpec((C, 2 * C), lambda b: (0, 0)),         # fusion weights
                pl.BlockSpec((C, 3), lambda b: (0, 0)),             # biases
            ],
            out_specs=pl.BlockSpec((None, C, T), lambda b: (b, 0, 0)),
        ),
        compiler_params=pltpu.CompilerParams(
            dimension_semantics=("parallel",),
            vmem_limit_bytes=vmem_limit),
        cost_estimate=pl.CostEstimate(flops=int(flops), transcendentals=0,
                                      bytes_accessed=int(bytes_accessed)),
    )(xp, w7_big, w3r, wf, bias_all)
    return out


# ----------------------------------------------------------------------------
# Pure-JAX reference (lax.conv) mirroring the PyTorch forward, for validation.
# ----------------------------------------------------------------------------
def reference(x, params, dilation=1):
    eps = 1e-5
    dn = ("NCH", "OIH", "NCH")

    def conv(x, w, pad, dil=1, groups=1):
        return lax.conv_general_dilated(
            x, w, window_strides=(1,), padding=[(pad, pad)],
            rhs_dilation=(dil,), dimension_numbers=dn,
            feature_group_count=groups)

    def bn(y, g, b, m, v):
        return (y - m[None, :, None]) / jnp.sqrt(v[None, :, None] + eps) \
               * g[None, :, None] + b[None, :, None]

    d = dilation
    b1 = conv(x, params["w3"], pad=d, dil=d) + params["b3"][None, :, None]
    b1 = jax.nn.relu(bn(b1, *params["bn3"]))
    b2 = conv(x, params["w7"], pad=3 * d, dil=d) + params["b7"][None, :, None]
    b2 = jax.nn.relu(bn(b2, *params["bn7"]))

    r = conv(x, params["dw"], pad=1, groups=x.shape[1]) + params["dwb"][None, :, None]
    r = conv(r, params["wpw"], pad=0) + params["pwb"][None, :, None]
    r = bn(r, *params["bnr"])

    fused = conv(jnp.concatenate([b1, b2], axis=1), params["wf"], pad=0) \
            + params["fb"][None, :, None]
    return jax.nn.relu(fused + r)


# ----------------------------------------------------------------------------
def make_params(key, C):
    ks = jax.random.split(key, 16)
    n = lambda k, s: (0.1 * jax.random.normal(k, s)).astype(jnp.float32)
    return {
        "w3": n(ks[0], (C, C, 3)), "b3": n(ks[1], (C,)),
        "w7": n(ks[2], (C, C, 7)), "b7": n(ks[3], (C,)),
        "dw": n(ks[4], (C, 1, 3)), "dwb": n(ks[5], (C,)),
        "wpw": n(ks[6], (C, C, 1)), "pwb": n(ks[7], (C,)),
        "wf": n(ks[8], (C, 2 * C, 1)), "fb": n(ks[9], (C,)),
        "bn3": (1.0 + n(ks[10], (C,)), n(ks[11], (C,)),
                n(ks[12], (C,)), 1.0 + jnp.abs(n(ks[13], (C,)))),
        "bn7": (1.0 + n(ks[14], (C,)), n(ks[15], (C,)),
                n(ks[0], (C,)) * 0.5, 1.0 + jnp.abs(n(ks[1], (C,)))),
        "bnr": (1.0 + n(ks[2], (C,)) * 0.5, n(ks[3], (C,)) * 0.5,
                n(ks[4], (C,)) * 0.5, 1.0 + jnp.abs(n(ks[5], (C,)))),
    }


if __name__ == "__main__":
    key = jax.random.PRNGKey(0)
    kx, kp, kx2 = jax.random.split(key, 3)

    # Case 1: module-sized smoke test, (B, C, T) = (2, 16, 16), dilation=1
    # (fused k3+residual matmul path, single time chunk).
    B, C, T = 2, 16, 16
    x = jax.random.normal(kx, (B, C, T), dtype=jnp.float32)
    params = make_params(kp, C)

    fwd = jax.jit(functools.partial(multi_scale_temporal_block, dilation=1))
    out = jax.block_until_ready(fwd(x, params))
    ref = jax.block_until_ready(reference(x, params, dilation=1))
    assert out.shape == (B, C, T)
    err = float(jnp.max(jnp.abs(out.astype(jnp.float32) - ref)))
    assert err < 5e-2, f"case1 max abs err {err}"   # bf16 MXU / bf16 output

    # Case 2: exercises multi-chunk compute, halos and dilation=2
    # (separate residual matmul path).
    B2, C2, T2 = 2, 16, 256
    x2 = jax.random.normal(kx2, (B2, C2, T2), dtype=jnp.float32)
    fwd2 = jax.jit(functools.partial(multi_scale_temporal_block,
                                     dilation=2, t_tile=128))
    out2 = jax.block_until_ready(fwd2(x2, params))
    ref2 = jax.block_until_ready(reference(x2, params, dilation=2))
    assert out2.shape == (B2, C2, T2)
    err2 = float(jnp.max(jnp.abs(out2.astype(jnp.float32) - ref2)))
    assert err2 < 5e-2, f"case2 max abs err {err2}"

    # TODO(synk): Dropout(0.2) and BatchNorm batch statistics (training mode)
    # are intentionally implemented with eval/inference semantics.
    print("KERNEL_OK")
</pallas_src>

<mosaic_0001>
module attributes {stable_mosaic.version = 11 : i64} {
  func.func @_msblock_kernel(%arg0: i32, %arg1: memref<1x16x22xbf16, #tpu.memory_space<vmem>>, %arg2: memref<16x112xbf16, #tpu.memory_space<vmem>>, %arg3: memref<32x48xbf16, #tpu.memory_space<vmem>>, %arg4: memref<16x32xbf16, #tpu.memory_space<vmem>>, %arg5: memref<16x3xf32, #tpu.memory_space<vmem>>, %arg6: memref<1x16x16xbf16, #tpu.memory_space<vmem>>) attributes {dimension_semantics = [#tpu.dimension_semantics<parallel>], iteration_bounds = array<i64: 2>, scalar_prefetch = 0 : i64, scratch_operands = 0 : i64, tpu.core_type = #tpu.core_type<tc>, window_params = [{transform_indices = @transform_0, window_bounds = array<i64: 1, 16, 22>}, {pipeline_mode = #tpu.pipeline_mode<synchronous>, transform_indices = @transform_1, window_bounds = array<i64: 16, 112>}, {pipeline_mode = #tpu.pipeline_mode<synchronous>, transform_indices = @transform_2, window_bounds = array<i64: 32, 48>}, {pipeline_mode = #tpu.pipeline_mode<synchronous>, transform_indices = @transform_3, window_bounds = array<i64: 16, 32>}, {pipeline_mode = #tpu.pipeline_mode<synchronous>, transform_indices = @transform_4, window_bounds = array<i64: 16, 3>}, {transform_indices = @transform_5, window_bounds = array<i64: 1, 16, 16>}]} {
    %c0 = arith.constant 0 : index
    %c0_0 = arith.constant 0 : index
    %0 = vector.load %arg2[%c0, %c0_0] : memref<16x112xbf16, #tpu.memory_space<vmem>>, vector<16x112xbf16>
    %c0_1 = arith.constant 0 : index
    %c0_2 = arith.constant 0 : index
    %1 = vector.load %arg3[%c0_1, %c0_2] : memref<32x48xbf16, #tpu.memory_space<vmem>>, vector<32x48xbf16>
    %c0_3 = arith.constant 0 : index
    %c0_4 = arith.constant 0 : index
    %2 = vector.load %arg4[%c0_3, %c0_4] : memref<16x32xbf16, #tpu.memory_space<vmem>>, vector<16x32xbf16>
    %c0_5 = arith.constant 0 : index
    %c0_6 = arith.constant 0 : index
    %3 = vector.load %arg5[%c0_5, %c0_6] : memref<16x3xf32, #tpu.memory_space<vmem>>, vector<16x1xf32>
    %c0_7 = arith.constant 0 : index
    %c1 = arith.constant 1 : index
    %4 = vector.load %arg5[%c0_7, %c1] : memref<16x3xf32, #tpu.memory_space<vmem>>, vector<16x1xf32>
    %c0_8 = arith.constant 0 : index
    %c2 = arith.constant 2 : index
    %5 = vector.load %arg5[%c0_8, %c2] : memref<16x3xf32, #tpu.memory_space<vmem>>, vector<16x1xf32>
    %c0_9 = arith.constant 0 : index
    %c0_10 = arith.constant 0 : index
    %c0_11 = arith.constant 0 : index
    %6 = vector.load %arg1[%c0_9, %c0_10, %c0_11] : memref<1x16x22xbf16, #tpu.memory_space<vmem>>, vector<1x16x22xbf16>
    %7 = vector.shape_cast %6 : vector<1x16x22xbf16> to vector<16x22xbf16>
    %8 = vector.extract_strided_slice %7 {offsets = [0, 0], sizes = [16, 16], strides = [1, 1]} : vector<16x22xbf16> to vector<16x16xbf16>
    %9 = vector.extract_strided_slice %7 {offsets = [0, 1], sizes = [16, 16], strides = [1, 1]} : vector<16x22xbf16> to vector<16x16xbf16>
    %10 = vector.extract_strided_slice %7 {offsets = [0, 2], sizes = [16, 16], strides = [1, 1]} : vector<16x22xbf16> to vector<16x16xbf16>
    %11 = vector.extract_strided_slice %7 {offsets = [0, 3], sizes = [16, 16], strides = [1, 1]} : vector<16x22xbf16> to vector<16x16xbf16>
    %12 = vector.extract_strided_slice %7 {offsets = [0, 4], sizes = [16, 16], strides = [1, 1]} : vector<16x22xbf16> to vector<16x16xbf16>
    %13 = vector.extract_strided_slice %7 {offsets = [0, 5], sizes = [16, 16], strides = [1, 1]} : vector<16x22xbf16> to vector<16x16xbf16>
    %14 = vector.extract_strided_slice %7 {offsets = [0, 6], sizes = [16, 16], strides = [1, 1]} : vector<16x22xbf16> to vector<16x16xbf16>
    %15 = tpu.concatenate %8, %9, %10, %11, %12, %13, %14 in 0 : vector<16x16xbf16>, vector<16x16xbf16>, vector<16x16xbf16>, vector<16x16xbf16>, vector<16x16xbf16>, vector<16x16xbf16>, vector<16x16xbf16> -> vector<112x16xbf16>
    %16 = tpu.concatenate %10, %11, %12 in 0 : vector<16x16xbf16>, vector<16x16xbf16>, vector<16x16xbf16> -> vector<48x16xbf16>
    %cst = arith.constant dense<0.000000e+00> : vector<16x16xf32>
    %17 = tpu.matmul %0, %15, %cst {dimension_numbers = #tpu.dot_dimension_numbers<[1], [0], [0], [1], [0, 0, 1, 1], [], []>} : vector<16x112xbf16>, vector<112x16xbf16>, vector<16x16xf32> -> vector<16x16xf32>
    %cst_12 = arith.constant dense<0.000000e+00> : vector<32x16xf32>
    %18 = tpu.matmul %1, %16, %cst_12 {dimension_numbers = #tpu.dot_dimension_numbers<[1], [0], [0], [1], [0, 0, 1, 1], [], []>} : vector<32x48xbf16>, vector<48x16xbf16>, vector<32x16xf32> -> vector<32x16xf32>
    %19 = vector.extract_strided_slice %18 {offsets = [0, 0], sizes = [16, 16], strides = [1, 1]} : vector<32x16xf32> to vector<16x16xf32>
    %20 = vector.extract_strided_slice %18 {offsets = [16, 0], sizes = [16, 16], strides = [1, 1]} : vector<32x16xf32> to vector<16x16xf32>
    %21 = vector.broadcast %3 : vector<16x1xf32> to vector<16x16xf32>
    %22 = arith.addf %19, %21 : vector<16x16xf32>
    %cst_13 = arith.constant 0.000000e+00 : f32
    %23 = vector.broadcast %cst_13 : f32 to vector<16x16xf32>
    %24 = arith.maximumf %22, %23 : vector<16x16xf32>
    %25 = vector.broadcast %4 : vector<16x1xf32> to vector<16x16xf32>
    %26 = arith.addf %17, %25 : vector<16x16xf32>
    %cst_14 = arith.constant 0.000000e+00 : f32
    %27 = vector.broadcast %cst_14 : f32 to vector<16x16xf32>
    %28 = arith.maximumf %26, %27 : vector<16x16xf32>
    %29 = tpu.concatenate %24, %28 in 0 : vector<16x16xf32>, vector<16x16xf32> -> vector<32x16xf32>
    %30 = arith.truncf %29 : vector<32x16xf32> to vector<32x16xbf16>
    %cst_15 = arith.constant dense<0.000000e+00> : vector<16x16xf32>
    %31 = tpu.matmul %2, %30, %cst_15 {dimension_numbers = #tpu.dot_dimension_numbers<[1], [0], [0], [1], [0, 0, 1, 1], [], []>} : vector<16x32xbf16>, vector<32x16xbf16>, vector<16x16xf32> -> vector<16x16xf32>
    %32 = arith.addf %31, %20 : vector<16x16xf32>
    %33 = vector.broadcast %5 : vector<16x1xf32> to vector<16x16xf32>
    %34 = arith.addf %32, %33 : vector<16x16xf32>
    %cst_16 = arith.constant 0.000000e+00 : f32
    %35 = vector.broadcast %cst_16 : f32 to vector<16x16xf32>
    %36 = arith.maximumf %34, %35 : vector<16x16xf32>
    %37 = arith.truncf %36 : vector<16x16xf32> to vector<16x16xbf16>
    %c0_17 = arith.constant 0 : index
    %c0_18 = arith.constant 0 : index
    %c0_19 = arith.constant 0 : index
    %38 = vector.load %arg6[%c0_17, %c0_18, %c0_19] : memref<1x16x16xbf16, #tpu.memory_space<vmem>>, vector<1x16x16xbf16>
    %39 = vector.shape_cast %38 : vector<1x16x16xbf16> to vector<16x16xbf16>
    %40 = vector.shape_cast %37 : vector<16x16xbf16> to vector<1x16x16xbf16>
    tpu.vector_store %arg6[%c0_17, %c0_18, %c0_19], %40 {strides = array<i32>} : memref<1x16x16xbf16, #tpu.memory_space<vmem>>, vector<1x16x16xbf16>,
    return
  }
  func.func @transform_0(%arg0: i32) -> (i32, i32, i32) {
    %c0_i32 = arith.constant 0 : i32
    %c0_i32_0 = arith.constant 0 : i32
    %c0_i32_1 = arith.constant 0 : i32
    return %arg0, %c0_i32, %c0_i32_0 : i32, i32, i32
  }
  func.func @transform_1(%arg0: i32) -> (i32, i32) {
    %c0_i32 = arith.constant 0 : i32
    %c0_i32_0 = arith.constant 0 : i32
    %c0_i32_1 = arith.constant 0 : i32
    return %c0_i32, %c0_i32_0 : i32, i32
  }
  func.func @transform_2(%arg0: i32) -> (i32, i32) {
    %c0_i32 = arith.constant 0 : i32
    %c0_i32_0 = arith.constant 0 : i32
    %c0_i32_1 = arith.constant 0 : i32
    return %c0_i32, %c0_i32_0 : i32, i32
  }
  func.func @transform_3(%arg0: i32) -> (i32, i32) {
    %c0_i32 = arith.constant 0 : i32
    %c0_i32_0 = arith.constant 0 : i32
    %c0_i32_1 = arith.constant 0 : i32
    return %c0_i32, %c0_i32_0 : i32, i32
  }
  func.func @transform_4(%arg0: i32) -> (i32, i32) {
    %c0_i32 = arith.constant 0 : i32
    %c0_i32_0 = arith.constant 0 : i32
    %c0_i32_1 = arith.constant 0 : i32
    return %c0_i32, %c0_i32_0 : i32, i32
  }
  func.func @transform_5(%arg0: i32) -> (i32, i32, i32) {
    %c0_i32 = arith.constant 0 : i32
    %c0_i32_0 = arith.constant 0 : i32
    %c0_i32_1 = arith.constant 0 : i32
    return %arg0, %c0_i32, %c0_i32_0 : i32, i32, i32
  }
}

</mosaic_0001>

<llo_original>
// kernel: multi_scale_temporal_block.1
$region0: #{multi_scale_temporal_block.1}
  #allocation0 [shape = 'u32[]', space=smem, size = 0x4, offset = 0x4, fixed_abs, tag = 'smem constant byte address 0x4 - core index']
  #allocation1 [shape = 'u32[72,128]{1,0:T(1,128)}', space=vmem, size = 0x9000, scoped, tag = 'internal scratch']
  %s0 = inlined_call_operand.vmem [shape: bf16[2,16,22], index: 0, kind: input, shape index: {}]
  %s1 = inlined_call_operand.vmem [shape: bf16[16,112], index: 1, kind: input, shape index: {}]
  %s2 = inlined_call_operand.vmem [shape: bf16[32,48], index: 2, kind: input, shape index: {}]
  %s3 = inlined_call_operand.vmem [shape: bf16[16,32], index: 3, kind: input, shape index: {}]
  %s4 = inlined_call_operand.vmem [shape: f32[16,3], index: 4, kind: input, shape index: {}]
  %s5 = inlined_call_operand.hbm [shape: bf16[2,16,16], index: 5, kind: output, shape index: {}]
  %s6 = sld [smem:[#allocation0]]
  $region53: #{multi_scale_temporal_block.1} parent=0
    _
  %s8 = ssub.s32 1, %s6
  %s9 = scalar_select 0, %s8, %s6
  $region1: #{multi_scale_temporal_block.1} parent=0
    #allocation2 [shape = 'u8[8192]{0}', space=vmem, size = 0x2000, scoped, tag = 'output window, operand 0']
    #allocation3 [shape = 's32[2]{0}', space=sflag, size = 0x8, scoped, tag = 'scoped memory for multi_scale_temporal_block.1']
    %10 = vsyncpa [#allocation3], 0
    %s11 = scalar_lea.sflag [#allocation3], 1
    %12 = vsyncpa %s11, 0
    loop: start=0, step=1, limit=4
    $region2: #{multi_scale_temporal_block.1} parent=1 // loop_pre_header
      _
    $region3: #{multi_scale_temporal_block.1} parent=1 // loop_header
      %s14 = sphi 0, %s18
      %p15 = scmp.ge.s32.totalorder %s14, 4
      %s24 = sphi 0, %s26
      %s27 = sphi 0, %s24
      %s28 = sphi 0, %s27
      %s44 = sphi 0, %s28
      %s48 = sphi 0, %s48
      %s50 = sphi 0, %s48
      %s51 = sphi 0, %s50
      %s65 = sphi 0, %s51
      %s69 = sphi 0, %s69
      %s71 = sphi 0, %s69
      %s72 = sphi 0, %s71
      %s86 = sphi 0, %s72
      %s90 = sphi 0, %s90
      %s92 = sphi 0, %s90
      %s93 = sphi 0, %s92
      %s107 = sphi 0, %s93
      %s111 = sphi 0, %s111
      %s113 = sphi 0, %s111
      %s114 = sphi 0, %s113
      %s128 = sphi 0, %s114
      %s134 = sphi 0, %s136
      %s137 = sphi 0, %s134
      %s138 = sphi 0, %s137
      %s154 = sphi 0, %s138
    $region4: #{multi_scale_temporal_block.1} parent=1 // loop_header_branch
      %17 = sbr.rel (%p15) target = $region8
    $region5: #{multi_scale_temporal_block.1} parent=1 // loop_body
      %s19 = ssub.s32 %s14, 1
      %s20 = ssub.s32 %s14, 2
      %s21 = sadd.s32 %s14, 1
      %s22 = ssub.s32 %s14, %s21
      %p23 = scmp.eq.s32.totalorder %s22, 0
      %s25 = sadd.s32 %s24, 1
      %s26 = scalar_select %p23, %s24, %s25
      %p29 = pneg %p23
      %p30 = scmp.eq.s32.totalorder %s14, 1
      %p31 = por %p29, %p30
      %p32 = scmp.ne.s32.totalorder %s24, %s27
      %p33 = scmp.eq.s32.totalorder %s14, 0
      %p34 = por %p32, %p33
      %p35 = scmp.ne.s32.totalorder %s24, %s27
      %p36 = scmp.eq.s32.totalorder %s19, 1
      %p37 = por %p35, %p36
      %p38 = scmp.ne.s32.totalorder %s27, %s28
      %p39 = scmp.eq.s32.totalorder %s19, 0
      %p40 = por %p38, %p39
      %p41 = scmp.ne.s32.totalorder %s27, %s28
      %p42 = scmp.eq.s32.totalorder %s20, 1
      %p43 = por %p41, %p42
      %p45 = scmp.ne.s32.totalorder %s28, %s44
      %p46 = scmp.eq.s32.totalorder %s20, 0
      %p47 = por %p45, %p46
      %s49 = sadd.s32 %s48, 1
      %p52 = scmp.eq.s32.totalorder %s14, 1
      %p53 = scmp.ne.s32.totalorder %s48, %s50
      %p54 = scmp.eq.s32.totalorder %s14, 0
      %p55 = por %p53, %p54
      %p56 = scmp.ne.s32.totalorder %s48, %s50
      %p57 = scmp.eq.s32.totalorder %s19, 1
      %p58 = por %p56, %p57
      %p59 = scmp.ne.s32.totalorder %s50, %s51
      %p60 = scmp.eq.s32.totalorder %s19, 0
      %p61 = por %p59, %p60
      %p62 = scmp.ne.s32.totalorder %s50, %s51
      %p63 = scmp.eq.s32.totalorder %s20, 1
      %p64 = por %p62, %p63
      %p66 = scmp.ne.s32.totalorder %s51, %s65
      %p67 = scmp.eq.s32.totalorder %s20, 0
      %p68 = por %p66, %p67
      %s70 = sadd.s32 %s69, 1
      %p73 = scmp.eq.s32.totalorder %s14, 1
      %p74 = scmp.ne.s32.totalorder %s69, %s71
      %p75 = scmp.eq.s32.totalorder %s14, 0
      %p76 = por %p74, %p75
      %p77 = scmp.ne.s32.totalorder %s69, %s71
      %p78 = scmp.eq.s32.totalorder %s19, 1
      %p79 = por %p77, %p78
      %p80 = scmp.ne.s32.totalorder %s71, %s72
      %p81 = scmp.eq.s32.totalorder %s19, 0
      %p82 = por %p80, %p81
      %p83 = scmp.ne.s32.totalorder %s71, %s72
      %p84 = scmp.eq.s32.totalorder %s20, 1
      %p85 = por %p83, %p84
      %p87 = scmp.ne.s32.totalorder %s72, %s86
      %p88 = scmp.eq.s32.totalorder %s20, 0
      %p89 = por %p87, %p88
      %s91 = sadd.s32 %s90, 1
      %p94 = scmp.eq.s32.totalorder %s14, 1
      %p95 = scmp.ne.s32.totalorder %s90, %s92
      %p96 = scmp.eq.s32.totalorder %s14, 0
      %p97 = por %p95, %p96
      %p98 = scmp.ne.s32.totalorder %s90, %s92
      %p99 = scmp.eq.s32.totalorder %s19, 1
      %p100 = por %p98, %p99
      %p101 = scmp.ne.s32.totalorder %s92, %s93
      %p102 = scmp.eq.s32.totalorder %s19, 0
      %p103 = por %p101, %p102
      %p104 = scmp.ne.s32.totalorder %s92, %s93
      %p105 = scmp.eq.s32.totalorder %s20, 1
      %p106 = por %p104, %p105
      %p108 = scmp.ne.s32.totalorder %s93, %s107
      %p109 = scmp.eq.s32.totalorder %s20, 0
      %p110 = por %p108, %p109
      %s112 = sadd.s32 %s111, 1
      %p115 = scmp.eq.s32.totalorder %s14, 1
      %p116 = scmp.ne.s32.totalorder %s111, %s113
      %p117 = scmp.eq.s32.totalorder %s14, 0
      %p118 = por %p116, %p117
      %p119 = scmp.ne.s32.totalorder %s111, %s113
      %p120 = scmp.eq.s32.totalorder %s19, 1
      %p121 = por %p119, %p120
      %p122 = scmp.ne.s32.totalorder %s113, %s114
      %p123 = scmp.eq.s32.totalorder %s19, 0
      %p124 = por %p122, %p123
      %p125 = scmp.ne.s32.totalorder %s113, %s114
      %p126 = scmp.eq.s32.totalorder %s20, 1
      %p127 = por %p125, %p126
      %p129 = scmp.ne.s32.totalorder %s114, %s128
      %p130 = scmp.eq.s32.totalorder %s20, 0
      %p131 = por %p129, %p130
      %s132 = ssub.s32 %s14, %s21
      %p133 = scmp.eq.s32.totalorder %s132, 0
      %s135 = sadd.s32 %s134, 1
      %s136 = scalar_select %p133, %s134, %s135
      %p139 = pneg %p133
      %p140 = scmp.eq.s32.totalorder %s14, 1
      %p141 = por %p139, %p140
      %p142 = scmp.ne.s32.totalorder %s134, %s137
      %p143 = scmp.eq.s32.totalorder %s14, 0
      %p144 = por %p142, %p143
      %p145 = scmp.ne.s32.totalorder %s134, %s137
      %p146 = scmp.eq.s32.totalorder %s19, 1
      %p147 = por %p145, %p146
      %p148 = scmp.ne.s32.totalorder %s137, %s138
      %p149 = scmp.eq.s32.totalorder %s19, 0
      %p150 = por %p148, %p149
      %p151 = scmp.ne.s32.totalorder %s137, %s138
      %p152 = scmp.eq.s32.totalorder %s20, 1
      %p153 = por %p151, %p152
      %p155 = scmp.ne.s32.totalorder %s138, %s154
      %p156 = scmp.eq.s32.totalorder %s20, 0
      %p157 = por %p155, %p156
      %p158 = scmp.le.s32.totalorder 1, %s14
      %p159 = scmp.lt.s32.totalorder %s14, 3
      %p160 = pnand %p158, %p159
      %p161 = pneg %p160
      // Predicated region
      $region9: #{multi_scale_temporal_block.1} parent=5 // pred_check
        _
      $region10: #{multi_scale_temporal_block.1} parent=5 // pred_check_branch
        %163 = sbr.rel (%p160) target = $region12
      $region11: #{multi_scale_temporal_block.1} parent=5 // pred_region
        %s164 = ssub.s32 %s14, 1
        // Predicated region
        $region13: #{multi_scale_temporal_block.1} parent=11 // pred_check
          %p165 = pneg %p61
        $region14: #{multi_scale_temporal_block.1} parent=11 // pred_check_branch
          %167 = sbr.rel (%p165) target = $region16
        $region15: #{multi_scale_temporal_block.1} parent=11 // pred_region
          _
        $region16: #{multi_scale_temporal_block.1} parent=11 // pred_fallthru
          _
        // Predicated region
        $region17: #{multi_scale_temporal_block.1} parent=11 // pred_check
          %p168 = pneg %p82
        $region18: #{multi_scale_temporal_block.1} parent=11 // pred_check_branch
          %170 = sbr.rel (%p168) target = $region20
        $region19: #{multi_scale_temporal_block.1} parent=11 // pred_region
          _
        $region20: #{multi_scale_temporal_block.1} parent=11 // pred_fallthru
          _
        // Predicated region
        $region21: #{multi_scale_temporal_block.1} parent=11 // pred_check
          %p171 = pneg %p103
        $region22: #{multi_scale_temporal_block.1} parent=11 // pred_check_branch
          %173 = sbr.rel (%p171) target = $region24
        $region23: #{multi_scale_temporal_block.1} parent=11 // pred_region
          _
        $region24: #{multi_scale_temporal_block.1} parent=11 // pred_fallthru
          _
        // Predicated region
        $region25: #{multi_scale_temporal_block.1} parent=11 // pred_check
          %p174 = pneg %p124
        $region26: #{multi_scale_temporal_block.1} parent=11 // pred_check_branch
          %176 = sbr.rel (%p174) target = $region28
        $region27: #{multi_scale_temporal_block.1} parent=11 // pred_region
          _
        $region28: #{multi_scale_temporal_block.1} parent=11 // pred_fallthru
          _
      $region12: #{multi_scale_temporal_block.1} parent=5 // pred_fallthru
        _
      %p177 = scmp.lt.s32.totalorder %s14, 2
      // Predicated region
      $region29: #{multi_scale_temporal_block.1} parent=5 // pred_check
        %p178 = pneg %p177
      $region30: #{multi_scale_temporal_block.1} parent=5 // pred_check_branch
        %180 = sbr.rel (%p178) target = $region32
      $region31: #{multi_scale_temporal_block.1} parent=5 // pred_region
        // Predicated region
        $region33: #{multi_scale_temporal_block.1} parent=31 // pred_check
          %p181 = pneg %p34
        $region34: #{multi_scale_temporal_block.1} parent=31 // pred_check_branch
          %183 = sbr.rel (%p181) target = $region36
        $region35: #{multi_scale_temporal_block.1} parent=31 // pred_region
          %p184 = scmp.lt.s32.totalorder %s14, 1
          %s185 = scalar_select %p184, %s14, 1
          %s186 = smul.addr %s185, 2
          %s187 = smul.addr %s186, 4
          %s188 = scalar_lea.vmem %s0, %s187
        $region36: #{multi_scale_temporal_block.1} parent=31 // pred_fallthru
          _
      $region32: #{multi_scale_temporal_block.1} parent=5 // pred_fallthru
        _
      %p189 = scmp.le.s32.totalorder 1, %s14
      %p190 = scmp.lt.s32.totalorder %s14, 3
      %p191 = pnand %p189, %p190
      %p192 = pneg %p191
      // Predicated region
      $region37: #{multi_scale_temporal_block.1} parent=5 // pred_check
        _
      $region38: #{multi_scale_temporal_block.1} parent=5 // pred_check_branch
        %194 = sbr.rel (%p191) target = $region40
      $region39: #{multi_scale_temporal_block.1} parent=5 // pred_region
        %s195 = ssub.s32 %s14, 1
        %p196 = scmp.lt.s32.totalorder %s19, 1
        %s197 = scalar_select %p196, %s19, 1
        %s198 = smul.addr %s197, 2
        %s199 = smul.addr %s198, 4
        %s200 = scalar_lea.vmem %s0, %s199
        %p201 = pneg %p40
        %p202 = pneg %p37
        %p203 = pneg %p61
        %p204 = pneg %p58
        %p205 = pneg %p82
        %p206 = pneg %p79
        %p207 = pneg %p103
        %p208 = pneg %p100
        %p209 = pneg %p124
        %p210 = pneg %p121
        %p211 = pneg %p150
        %p212 = pneg %p147
        %s213 = sand.u32 %s137, 1
        %s214 = scalar_lea.sflag [#allocation3], %s213
        %s215 = sand.u32 %s137, 1
        %s216 = smul.addr %s215, 8
        %s217 = scalar_lea.vmem [#allocation2], %s216
        %p218 = scmp.lt.s32.totalorder %s19, 1
        %s219 = scalar_select %p218, %s19, 1
        %s220 = smul.addr %s219, 2
        %s221 = smul.addr %s220, 4
        %s222 = scalar_lea.vmem %s0, %s221
        %v224 = vld [vmem:[%s1] sm:$0xf]
        %v225 = vld [vmem:[%s1 + $0x4] sm:$0xf]
        %v226 = vld [vmem:[%s2] sm:$0xf]
        %v227 = vld [vmem:[%s2 + $0x4] sm:$0xf]
        %v228 = vld [vmem:[%s2 + $0x8] sm:$0xf]
        %v229 = vld [vmem:[%s2 + $0xc] sm:$0xf]
        %v230 = vld [vmem:[%s3] sm:$0xf]
        %v231 = vld [vmem:[%s3 + $0x4] sm:$0xf]
        %v232 = vld [vmem:[%s4] sm:$0xff]
        %v233 = vld [vmem:[%s4 + $0x8] sm:$0xff]
        %v234 = vld [vmem:[%s222] sm:$0xf]
        %v235 = vld [vmem:[%s222 + $0x4] sm:$0xf]
        %v238 = vunpack.c.l.b16 %v234
        %v239 = vunpack.c.l.b16 %v235
        %v240 = vpack.c.b16 %v239, %v238
        %242 = vrot.lane.b32.xlu0 %v240, 127
        %v243 = vpop.permute.xlu0 %242
        %245 = vrot.lane.b32.xlu0 %v240, 126
        %v246 = vpop.permute.xlu0 %245
        %248 = vrot.lane.b32.xlu0 %v240, 125
        %v249 = vpop.permute.xlu0 %248
        %251 = vrot.lane.b32.xlu0 %v240, 124
        %v252 = vpop.permute.xlu0 %251
        %254 = vrot.lane.b32.xlu0 %v240, 123
        %v255 = vpop.permute.xlu0 %254
        %257 = vrot.lane.b32.xlu0 %v240, 122
        %v258 = vpop.permute.xlu0 %257
        %v264 = vunpack.c.l.b16 %v226
        %v265 = vunpack.c.l.b16 %v227
        %v266 = vunpack.c.l.b16 %v228
        %v267 = vunpack.c.l.b16 %v229
        %v268 = vpack.c.b16 %v265, %v264
        %v269 = vpack.c.b16 %v267, %v266
        %270 = vrot.lane.b32.xlu0 %v243, 126
        %v271 = vpop.permute.xlu0 %270
        %272 = vrot.lane.b32.xlu0 %v246, 126
        %v273 = vpop.permute.xlu0 %272
        %vm276 = vcmask 392192
        %v278 = vsel %vm276, %v268, 0
        %v281 = vsel %vm276, %v269, 0
        %283 = vmatpush.bf16.msra.mxu0 0
        %284 = vmatpush.bf16.msra.mxu0 0
        %285 = vmatpush.bf16.msra.mxu0 0
        %286 = vmatpush.bf16.msra.mxu0 0
        %287 = vmatpush.bf16.msra.mxu0 0
        %288 = vmatpush.bf16.msra.mxu0 %v273
        %289 = vmatpush.bf16.msra.mxu0 %v271
        %290 = vmatpush.bf16.msra.mxu0 %v246
        %291 = vmatmul.bf16.gmra.mxu0 %v278
        %v292 = vpop.f32.mrf.mxu0
        %v293 = vadd.f32 0.0, %v292
        %v294 = vpop.f32.mrf.mxu0
        %v295 = vadd.f32 0.0, %v294
        %296 = vmatmul.bf16.gmra.mxu0 %v281
        %v297 = vpop.f32.mrf.mxu0
        %v298 = vadd.f32 0.0, %v297
        %v299 = vpop.f32.mrf.mxu0
        %v300 = vadd.f32 0.0, %v299
        %301 = vdwg.mxu0
        %303 = vset.pattern.permute.xlu0 0
        %304 = vperm.xlu0 %303, %v232
        %v305 = vpop.permute.xlu0 %304
        %308 = vset.pattern.permute.xlu0 0
        %309 = vperm.xlu0 %308, %v233
        %v310 = vpop.permute.xlu0 %309
        %v312 = vadd.f32 %v293, %v305
        %v313 = vadd.f32 %v295, %v310
        %v314 = vmax.f32 %v312, 0.0
        %v315 = vmax.f32 %v313, 0.0
        %316 = vset.pattern.permute.xlu0 1
        %317 = vperm.xlu0 %316, %v232
        %v318 = vpop.permute.xlu0 %317
        %320 = vset.pattern.permute.xlu0 1
        %321 = vperm.xlu0 %320, %v233
        %v322 = vpop.permute.xlu0 %321
        %v326 = vunpack.c.l.b16 %v224
        %v327 = vunpack.c.l.b16 %v225
        %v328 = vpack.c.b16 %v327, %v326
        %vm329 = vcmask 916480
        %v331 = vsel %vm329, %v328, 0
        %333 = vmatpush.bf16.msra.mxu0 0
        %334 = vmatpush.bf16.msra.mxu0 %v258
        %335 = vmatpush.bf16.msra.mxu0 %v255
        %336 = vmatpush.bf16.msra.mxu0 %v252
        %337 = vmatpush.bf16.msra.mxu0 %v249
        %338 = vmatpush.bf16.msra.mxu0 %v246
        %339 = vmatpush.bf16.msra.mxu0 %v243
        %340 = vmatpush.bf16.msra.mxu0 %v240
        %341 = vmatmul.bf16.gmra.mxu0 %v331
        %v342 = vpop.f32.mrf.mxu0
        %v343 = vadd.f32 %v318, %v342
        %v344 = vpop.f32.mrf.mxu0
        %v345 = vadd.f32 %v322, %v344
        %346 = vdwg.mxu0
        %v347 = vmax.f32 %v343, 0.0
        %v348 = vmax.f32 %v345, 0.0
        %v349 = vpack.c.bf16 %v315, %v314
        %v350 = vpack.c.bf16 %v348, %v347
        %v353 = vunpack.c.l.b16 %v230
        %v354 = vunpack.c.l.b16 %v231
        %v355 = vpack.c.b16 %v354, %v353
        %vm356 = vcmask 261120
        %v358 = vsel %vm356, %v355, 0
        %360 = vmatpush.bf16.msra.mxu0 0
        %361 = vmatpush.bf16.msra.mxu0 0
        %362 = vmatpush.bf16.msra.mxu0 0
        %363 = vmatpush.bf16.msra.mxu0 0
        %364 = vmatpush.bf16.msra.mxu0 0
        %365 = vmatpush.bf16.msra.mxu0 0
        %366 = vmatpush.bf16.msra.mxu0 %v350
        %367 = vmatpush.bf16.msra.mxu0 %v349
        %368 = vmatmul.bf16.gmra.mxu0 %v358
        %v369 = vpop.f32.mrf.mxu0
        %v370 = vadd.f32 %v298, %v369
        %v371 = vpop.f32.mrf.mxu0
        %v372 = vadd.f32 %v300, %v371
        %373 = vdwg.mxu0
        %374 = vset.pattern.permute.xlu0 2
        %375 = vperm.xlu0 %374, %v232
        %v376 = vpop.permute.xlu0 %375
        %378 = vset.pattern.permute.xlu0 2
        %379 = vperm.xlu0 %378, %v233
        %v380 = vpop.permute.xlu0 %379
        %v382 = vadd.f32 %v370, %v376
        %v383 = vadd.f32 %v372, %v380
        %v384 = vmax.f32 %v382, 0.0
        %v385 = vmax.f32 %v383, 0.0
        %v386 = vpack.c.bf16 %v384, %v384
        %v387 = vpack.c.bf16 %v385, %v385
        %vm388 = vcmask 125952
        %389 = vst.msk [vmem:[%s217] sm:$0xf] %vm388, %v386
        %390 = vst.msk [vmem:[%s217 + $0x4] sm:$0xf] %vm388, %v387
        %s391 = sand.u32 %s137, 1
        %s392 = scalar_lea.sflag [#allocation3], %s391
        %s393 = sand.u32 %s137, 1
        %s394 = smul.addr %s393, 8
        %s395 = scalar_lea.vmem [#allocation2], %s394
        // Predicated region
        $region41: #{multi_scale_temporal_block.1} parent=39 // pred_check
          %p396 = pneg %p147
        $region42: #{multi_scale_temporal_block.1} parent=39 // pred_check_branch
          %398 = sbr.rel (%p396) target = $region44
        $region43: #{multi_scale_temporal_block.1} parent=39 // pred_region
          %400 = vsyncadd %s392, 0
          %s401 = smul.addr %s19, 2
          %s402 = smul.addr %s401, 4
          %s403 = scalar_lea.hbm %s5, %s402
          %s404 = sshll.u32 %s395, 4
          %s405 = int_to_ptr.vmem [resolvable:$true] %s404
          %s406 = sshll.u32 %s403, 4
          %s407 = int_to_ptr.hbm [resolvable:$true] %s406
          %412 = dma.vmem_to_hbm [thread:$0]  %s405, 128, %s407, %s392, 64, 64, 4
        $region44: #{multi_scale_temporal_block.1} parent=39 // pred_fallthru
          _
      $region40: #{multi_scale_temporal_block.1} parent=5 // pred_fallthru
        _
      %p413 = scmp.le.s32.totalorder 2, %s14
      // Predicated region
      $region45: #{multi_scale_temporal_block.1} parent=5 // pred_check
        %p414 = pneg %p413
      $region46: #{multi_scale_temporal_block.1} parent=5 // pred_check_branch
        %416 = sbr.rel (%p414) target = $region48
      $region47: #{multi_scale_temporal_block.1} parent=5 // pred_region
        %s417 = ssub.s32 %s14, 2
        // Predicated region
        $region49: #{multi_scale_temporal_block.1} parent=47 // pred_check
          %p418 = pneg %p153
        $region50: #{multi_scale_temporal_block.1} parent=47 // pred_check_branch
          %420 = sbr.rel (%p418) target = $region52
        $region51: #{multi_scale_temporal_block.1} parent=47 // pred_region
          %s421 = sand.u32 %s138, 1
          %s422 = scalar_lea.sflag [#allocation3], %s421
          %s423 = sand.u32 %s138, 1
          %s424 = smul.addr %s423, 8
          %s425 = scalar_lea.vmem [#allocation2], %s424
          %427 = dma.done %s422, 128
        $region52: #{multi_scale_temporal_block.1} parent=47 // pred_fallthru
          _
      $region48: #{multi_scale_temporal_block.1} parent=5 // pred_fallthru
        _
    $region6: #{multi_scale_temporal_block.1} parent=1 // loop_footer
      %s18 = sadd.s32 1, %s14
    $region7: #{multi_scale_temporal_block.1} parent=1 // loop_footer_branch
      %13 = sbr.rel target = $region3
    $region8: #{multi_scale_temporal_block.1} parent=1 // loop_exit
      _
    %428 = vsyncpa [#allocation3], 1
    %s429 = scalar_lea.sflag [#allocation3], 1
    %430 = vsyncpa %s429, 1

</llo_original>
